<compile_context>
chip_gen: v5e
topology: v5e:2x2
jax: 0.10.0
libtpu: 0.0.40
codegen_flags: <defaults>
</compile_context>

<pallas_src>
import jax
import jax.numpy as jnp
from jax.experimental import pallas as pl
from jax.experimental.pallas import tpu as pltpu

_LANE = 128          # lane width of the packed slabs
_MAX_TM = 2048       # max rows per block -> 2048*128*4B = 1 MiB/block


def _unified_scales_kernel(params_ref, x1_ref, x2_ref, o_ref):
    # params_ref: SMEM (8,) = [w1, b1, w2, b2, w3, b3, w4, b4]  (scalar prefetch)
    # x1_ref/x2_ref: VMEM (TM, 128) lane-dense tiles of the two width halves
    # o_ref:         VMEM (TM, 128) lane-dense output tile
    w1 = params_ref[0]
    b1 = params_ref[1]
    w2 = params_ref[2]
    b2 = params_ref[3]
    w3 = params_ref[4]
    b3 = params_ref[5]
    w4 = params_ref[6]
    b4 = params_ref[7]

    b12 = b1 + b2  # hoisted scalar add (SMEM/sreg, not per-element VPU work)

    # conv2d_1 / conv2d_2 (1x1, 1->1 channel) + add
    y = w1 * x1_ref[...] + (w2 * x2_ref[...] + b12)

    # cat([y, y], dim=-1).chunk(2) -> both halves are y; conv3/conv4 then mul.
    o_ref[...] = (w3 * y + b3) * (w4 * y + b4)


def unified_scales_forward(x_nchw, params):
    """x_nchw: (N, 1, H, W) float32; params: (8,) float32 [w1,b1,w2,b2,w3,b3,w4,b4]."""
    N, C, H, W = x_nchw.shape
    assert C == 1, "module is defined for a single channel"
    assert W % 2 == 0
    half = W // 2
    total = N * H * half  # elements per half / per output

    # Pre-split the width halves in the wrapper and flatten each to a
    # lane-dense (rows, 128) slab so the kernel does no lane slicing.
    x1_flat = x_nchw[..., :half].reshape(-1)
    x2_flat = x_nchw[..., half:].reshape(-1)

    rows = -(-total // _LANE)  # ceil div
    if rows <= _MAX_TM:
        tm = rows                      # single block == full array (always legal)
        padded_rows = rows
        grid_m = 1
    else:
        tm = _MAX_TM                   # (2048, 128) blocks, divisible by (8, 128)
        grid_m = -(-rows // tm)
        padded_rows = grid_m * tm

    padded = padded_rows * _LANE
    if padded != total:
        pad = padded - total
        x1_flat = jnp.pad(x1_flat, (0, pad))
        x2_flat = jnp.pad(x2_flat, (0, pad))

    x1_2d = x1_flat.reshape(padded_rows, _LANE)
    x2_2d = x2_flat.reshape(padded_rows, _LANE)

    out2d = pl.pallas_call(
        _unified_scales_kernel,
        out_shape=jax.ShapeDtypeStruct((padded_rows, _LANE), x_nchw.dtype),
        grid_spec=pltpu.PrefetchScalarGridSpec(
            num_scalar_prefetch=1,            # params -> SMEM
            grid=(grid_m,),
            in_specs=[
                pl.BlockSpec((tm, _LANE), lambda i, p: (i, 0)),
                pl.BlockSpec((tm, _LANE), lambda i, p: (i, 0)),
            ],
            out_specs=pl.BlockSpec((tm, _LANE), lambda i, p: (i, 0)),
        ),
        compiler_params=pltpu.CompilerParams(
            dimension_semantics=("parallel",),   # shard rows across TCs (v7x)
        ),
    )(params, x1_2d, x2_2d)

    out_flat = out2d.reshape(-1)[:total]
    return out_flat.reshape(N, 1, H, half)


def _reference_forward(x_nchw, params):
    """Plain-JAX reference mirroring the torch forward semantics."""
    w1, b1, w2, b2, w3, b3, w4, b4 = [params[i] for i in range(8)]
    half = x_nchw.shape[-1] // 2
    in_1 = x_nchw[..., :half]
    in_2 = x_nchw[..., half:]
    in_1 = w1 * in_1 + b1
    in_2 = w2 * in_2 + b2
    x = in_1 + in_2
    x = jnp.concatenate([x, x], axis=-1)
    in_1 = x[..., :half]
    in_2 = x[..., half:]
    in_1 = w3 * in_1 + b3
    in_2 = w4 * in_2 + b4
    return in_1 * in_2


if __name__ == "__main__":
    key = jax.random.PRNGKey(0)
    k_x, k_p = jax.random.split(key)

    # Small shapes consistent with the module: N=2, C=1, H=16, W=16.
    N, C, H, W = 2, 1, 16, 16
    x = jax.random.normal(k_x, (N, C, H, W), dtype=jnp.float32)

    # Each Conv2d(1, 1, 1) has one scalar weight and one scalar bias ->
    # 8 scalars total: [w1, b1, w2, b2, w3, b3, w4, b4].
    params = jax.random.uniform(
        k_p, (8,), dtype=jnp.float32, minval=-1.0, maxval=1.0
    )

    out = unified_scales_forward(x, params)
    out = jax.block_until_ready(out)

    ref = _reference_forward(x, params)
    assert out.shape == (N, 1, H, W // 2), out.shape
    assert jnp.allclose(out, ref, atol=1e-5, rtol=1e-5), "mismatch vs reference"

    print("KERNEL_OK")
</pallas_src>

<mosaic_0001>
module attributes {stable_mosaic.version = 11 : i64} {
  func.func @_unified_scales_kernel(%arg0: i32, %arg1: memref<8xf32, #tpu.memory_space<smem>>, %arg2: memref<2x128xf32, #tpu.memory_space<vmem>>, %arg3: memref<2x128xf32, #tpu.memory_space<vmem>>, %arg4: memref<2x128xf32, #tpu.memory_space<vmem>>) attributes {dimension_semantics = [#tpu.dimension_semantics<parallel>], iteration_bounds = array<i64: 1>, scalar_prefetch = 1 : i64, scratch_operands = 0 : i64, tpu.core_type = #tpu.core_type<tc>, window_params = [{transform_indices = @transform_0, window_bounds = array<i64: 2, 128>}, {transform_indices = @transform_1, window_bounds = array<i64: 2, 128>}, {transform_indices = @transform_2, window_bounds = array<i64: 2, 128>}]} {
    %c0 = arith.constant 0 : index
    %0 = memref.load %arg1[%c0] : memref<8xf32, #tpu.memory_space<smem>>
    %c1 = arith.constant 1 : index
    %1 = memref.load %arg1[%c1] : memref<8xf32, #tpu.memory_space<smem>>
    %c2 = arith.constant 2 : index
    %2 = memref.load %arg1[%c2] : memref<8xf32, #tpu.memory_space<smem>>
    %c3 = arith.constant 3 : index
    %3 = memref.load %arg1[%c3] : memref<8xf32, #tpu.memory_space<smem>>
    %c4 = arith.constant 4 : index
    %4 = memref.load %arg1[%c4] : memref<8xf32, #tpu.memory_space<smem>>
    %c5 = arith.constant 5 : index
    %5 = memref.load %arg1[%c5] : memref<8xf32, #tpu.memory_space<smem>>
    %c6 = arith.constant 6 : index
    %6 = memref.load %arg1[%c6] : memref<8xf32, #tpu.memory_space<smem>>
    %c7 = arith.constant 7 : index
    %7 = memref.load %arg1[%c7] : memref<8xf32, #tpu.memory_space<smem>>
    %8 = arith.addf %1, %3 : f32
    %c0_0 = arith.constant 0 : index
    %c0_1 = arith.constant 0 : index
    %9 = vector.load %arg2[%c0_0, %c0_1] : memref<2x128xf32, #tpu.memory_space<vmem>>, vector<2x128xf32>
    %10 = vector.broadcast %0 : f32 to vector<2x128xf32>
    %11 = arith.mulf %10, %9 : vector<2x128xf32>
    %c0_2 = arith.constant 0 : index
    %c0_3 = arith.constant 0 : index
    %12 = vector.load %arg3[%c0_2, %c0_3] : memref<2x128xf32, #tpu.memory_space<vmem>>, vector<2x128xf32>
    %13 = vector.broadcast %2 : f32 to vector<2x128xf32>
    %14 = arith.mulf %13, %12 : vector<2x128xf32>
    %15 = vector.broadcast %8 : f32 to vector<2x128xf32>
    %16 = arith.addf %14, %15 : vector<2x128xf32>
    %17 = arith.addf %11, %16 : vector<2x128xf32>
    %18 = vector.broadcast %4 : f32 to vector<2x128xf32>
    %19 = arith.mulf %18, %17 : vector<2x128xf32>
    %20 = vector.broadcast %5 : f32 to vector<2x128xf32>
    %21 = arith.addf %19, %20 : vector<2x128xf32>
    %22 = vector.broadcast %6 : f32 to vector<2x128xf32>
    %23 = arith.mulf %22, %17 : vector<2x128xf32>
    %24 = vector.broadcast %7 : f32 to vector<2x128xf32>
    %25 = arith.addf %23, %24 : vector<2x128xf32>
    %26 = arith.mulf %21, %25 : vector<2x128xf32>
    %c0_4 = arith.constant 0 : index
    %c0_5 = arith.constant 0 : index
    %27 = vector.load %arg4[%c0_4, %c0_5] : memref<2x128xf32, #tpu.memory_space<vmem>>, vector<2x128xf32>
    tpu.vector_store %arg4[%c0_4, %c0_5], %26 {strides = array<i32>} : memref<2x128xf32, #tpu.memory_space<vmem>>, vector<2x128xf32>,
    return
  }
  func.func @transform_0(%arg0: i32, %arg1: memref<8xf32, #tpu.memory_space<smem>>) -> (i32, i32) {
    %c0_i32 = arith.constant 0 : i32
    %c0_i32_0 = arith.constant 0 : i32
    return %arg0, %c0_i32 : i32, i32
  }
  func.func @transform_1(%arg0: i32, %arg1: memref<8xf32, #tpu.memory_space<smem>>) -> (i32, i32) {
    %c0_i32 = arith.constant 0 : i32
    %c0_i32_0 = arith.constant 0 : i32
    return %arg0, %c0_i32 : i32, i32
  }
  func.func @transform_2(%arg0: i32, %arg1: memref<8xf32, #tpu.memory_space<smem>>) -> (i32, i32) {
    %c0_i32 = arith.constant 0 : i32
    %c0_i32_0 = arith.constant 0 : i32
    return %arg0, %c0_i32 : i32, i32
  }
}

</mosaic_0001>

<llo_original>
// kernel: tpu_custom_call.1
$region0: #{tpu_custom_call.1}
  #allocation0 [shape = 'u32[]', space=smem, size = 0x4, offset = 0x4, fixed_abs, tag = 'smem constant byte address 0x4 - core index']
  #allocation1 [shape = 'u32[72,128]{1,0:T(1,128)}', space=vmem, size = 0x9000, scoped, tag = 'internal scratch']
  #allocation2 [shape = 's32[1]{0}', space=sflag, size = 0x4, scoped, tag = 'scoped memory for tpu_custom_call.1']
  #allocation3 [shape = 'u8[512]{0}', space=smem, size = 0x200, scoped, tag = 'prefetched SMEM operand 0']
  %s0 = inlined_call_operand.hbm [shape: f32[8], index: 0, kind: input, shape index: {}]
  %s1 = inlined_call_operand.hbm [shape: f32[2,128], index: 1, kind: input, shape index: {}]
  %s2 = inlined_call_operand.hbm [shape: f32[2,128], index: 2, kind: input, shape index: {}]
  %s3 = inlined_call_operand.hbm [shape: f32[2,128], index: 3, kind: output, shape index: {}]
  %s4 = sld [smem:[#allocation0]]
  $region26: #{tpu_custom_call.1} parent=0
    _
  %s6 = ssub.s32 1, %s4
  %s7 = scalar_select 0, %s6, %s4
  %s9 = sshll.u32 %s0, 4
  %s10 = int_to_ptr.hbm [resolvable:$true] %s9
  %12 = dma.hbm_to_smem %s10, 16, [#allocation3], [#allocation2]
  %14 = dma.done [#allocation2], 16
  %15 = sfence
  $region1: #{tpu_custom_call.1} parent=0
    #allocation4 [shape = 'u8[1024]{0}', space=vmem, size = 0x400, scoped, tag = 'input window, operand 1, single buffered']
    #allocation5 [shape = 's32[1]{0}', space=sflag, size = 0x4, scoped, tag = 'scoped memory for tpu_custom_call.1']
    #allocation6 [shape = 's32[1]{0}', space=sflag, size = 0x4, scoped, tag = 'scoped memory for tpu_custom_call.1']
    #allocation7 [shape = 'u8[1024]{0}', space=vmem, size = 0x400, scoped, tag = 'input window, operand 2, single buffered']
    #allocation8 [shape = 's32[1]{0}', space=sflag, size = 0x4, scoped, tag = 'scoped memory for tpu_custom_call.1']
    #allocation9 [shape = 'u8[1024]{0}', space=vmem, size = 0x400, scoped, tag = 'output window, operand 0, single buffered']
    %16 = vsyncpa [#allocation5], 0
    %17 = vsyncpa [#allocation8], 0
    %18 = vsyncpa [#allocation6], 0
    // Predicated region
    $region2: #{tpu_custom_call.1} parent=1 // pred_check
      _
    $region3: #{tpu_custom_call.1} parent=1 // pred_check_branch
      %20 = sbr.rel (0) target = $region5
    $region4: #{tpu_custom_call.1} parent=1 // pred_region
      %22 = vsyncadd [#allocation5], 0
      %s24 = sshll.u32 %s1, 4
      %s25 = int_to_ptr.hbm [resolvable:$true] %s24
      %s26 = sshll.u32 [#allocation4], 4
      %s27 = int_to_ptr.vmem [resolvable:$true] %s26
      %29 = dma.hbm_to_vmem [thread:$0]  %s25, 32, %s27, [#allocation5]
    $region5: #{tpu_custom_call.1} parent=1 // pred_fallthru
      _
    // Predicated region
    $region6: #{tpu_custom_call.1} parent=1 // pred_check
      _
    $region7: #{tpu_custom_call.1} parent=1 // pred_check_branch
      %31 = sbr.rel (0) target = $region9
    $region8: #{tpu_custom_call.1} parent=1 // pred_region
      %33 = vsyncadd [#allocation8], 0
      %s35 = sshll.u32 %s2, 4
      %s36 = int_to_ptr.hbm [resolvable:$true] %s35
      %s37 = sshll.u32 [#allocation7], 4
      %s38 = int_to_ptr.vmem [resolvable:$true] %s37
      %40 = dma.hbm_to_vmem [thread:$0]  %s36, 32, %s38, [#allocation8]
    $region9: #{tpu_custom_call.1} parent=1 // pred_fallthru
      _
    // Predicated region
    $region10: #{tpu_custom_call.1} parent=1 // pred_check
      _
    $region11: #{tpu_custom_call.1} parent=1 // pred_check_branch
      %42 = sbr.rel (0) target = $region13
    $region12: #{tpu_custom_call.1} parent=1 // pred_region
      %44 = dma.done [#allocation5], 32
    $region13: #{tpu_custom_call.1} parent=1 // pred_fallthru
      _
    // Predicated region
    $region14: #{tpu_custom_call.1} parent=1 // pred_check
      _
    $region15: #{tpu_custom_call.1} parent=1 // pred_check_branch
      %46 = sbr.rel (0) target = $region17
    $region16: #{tpu_custom_call.1} parent=1 // pred_region
      %48 = dma.done [#allocation8], 32
    $region17: #{tpu_custom_call.1} parent=1 // pred_fallthru
      _
    %s49 = sld [smem:[#allocation3]]
    %s50 = sld [smem:[#allocation3 + $0x1]]
    %s51 = sld [smem:[#allocation3 + $0x2]]
    %s52 = sld [smem:[#allocation3 + $0x3]]
    %s53 = sld [smem:[#allocation3 + $0x4]]
    %s54 = sld [smem:[#allocation3 + $0x5]]
    %s55 = sld [smem:[#allocation3 + $0x6]]
    %s56 = sld [smem:[#allocation3 + $0x7]]
    %s57 = sadd.f32 %s50, %s52
    %v58 = vld [vmem:[#allocation4] sm:$0x3]
    %v59 = vstv %s49
    %v60 = vmul.f32 %v59, %v58
    %v61 = vld [vmem:[#allocation7] sm:$0x3]
    %v62 = vstv %s51
    %v63 = vmul.f32 %v62, %v61
    %v64 = vstv %s57
    %v65 = vadd.f32 %v63, %v64
    %v66 = vadd.f32 %v60, %v65
    %v67 = vstv %s53
    %v68 = vmul.f32 %v67, %v66
    %v69 = vstv %s54
    %v70 = vadd.f32 %v68, %v69
    %v71 = vstv %s55
    %v72 = vmul.f32 %v71, %v66
    %v73 = vstv %s56
    %v74 = vadd.f32 %v72, %v73
    %v75 = vmul.f32 %v70, %v74
    %76 = vst [vmem:[#allocation9] sm:$0x3] %v75
    // Predicated region
    $region18: #{tpu_custom_call.1} parent=1 // pred_check
      _
    $region19: #{tpu_custom_call.1} parent=1 // pred_check_branch
      %78 = sbr.rel (0) target = $region21
    $region20: #{tpu_custom_call.1} parent=1 // pred_region
      %80 = vsyncadd [#allocation6], 0
      %s82 = sshll.u32 [#allocation9], 4
      %s83 = int_to_ptr.vmem [resolvable:$true] %s82
      %s84 = sshll.u32 %s3, 4
      %s85 = int_to_ptr.hbm [resolvable:$true] %s84
      %87 = dma.vmem_to_hbm [thread:$0]  %s83, 32, %s85, [#allocation6]
    $region21: #{tpu_custom_call.1} parent=1 // pred_fallthru
      _
    // Predicated region
    $region22: #{tpu_custom_call.1} parent=1 // pred_check
      _
    $region23: #{tpu_custom_call.1} parent=1 // pred_check_branch
      %89 = sbr.rel (0) target = $region25
    $region24: #{tpu_custom_call.1} parent=1 // pred_region
      %91 = dma.done [#allocation6], 32
    $region25: #{tpu_custom_call.1} parent=1 // pred_fallthru
      _
    %92 = vsyncpa [#allocation5], 1
    %93 = vsyncpa [#allocation8], 1
    %94 = vsyncpa [#allocation6], 1

</llo_original>
